<compile_context>
chip_gen: v7x
topology: tpu7x:2x2x1
jax: 0.10.0
libtpu: 0.0.40
codegen_flags: <defaults>
</compile_context>

<pallas_src>
import math

import jax
import jax.numpy as jnp
from jax.experimental import pallas as pl
from jax.experimental.pallas import tpu as pltpu


_TARGET_OUT_BYTES = 4 << 20    # ~4 MiB of output per grid step (amortizes ~0.35 us/step)
_VMEM_BLOCK_BUDGET = 24 << 20  # cap for double-buffered (in + out) tiled block bytes
_VMEM_LIMIT_BYTES = 32 << 20   # explicit scoped-VMEM limit (<= physical on all gens)


def _cdiv(a, b):
    return -(-a // b)


def _round_up(a, b):
    return _cdiv(a, b) * b


def _native_sublane(dtype):
    # Native VMEM tiling: (8,128) for 4-byte, (16,128) for 2-byte, (32,128) for 1-byte.
    return max(8, 32 // jnp.dtype(dtype).itemsize)


def _tiled_block_bytes(block_shape, dtype):
    """VMEM bytes of one buffered copy of `block_shape`, including tile padding."""
    itemsize = jnp.dtype(dtype).itemsize
    if len(block_shape) < 2:
        n = block_shape[0] if block_shape else 1
        return _round_up(n * itemsize, 512)
    lead = math.prod(block_shape[:-2])
    s_sub, s_lane = block_shape[-2], block_shape[-1]
    return (lead * _round_up(s_sub, _native_sublane(dtype))
            * _round_up(s_lane, 128) * itemsize)


def _make_pad_kernel(interior):
    """`interior` is a static tuple of slices selecting the unpadded region of o_ref."""

    def kernel(x_ref, o_ref):
        # Zero-fill the block once, then overwrite the interior with a single
        # static slice store.  In the channels-last path both stores are
        # full-lane (last dim is a 128-multiple, lane offset 0); in the
        # spatial-last fallback the interior store may be lane-masked, but
        # that path is only taken for small channel counts (negligible data)
        # or wide-W images (where zero-fill + interior is review-preferred).
        o_ref[...] = jnp.zeros_like(o_ref)
        o_ref[interior] = x_ref[...]

    return kernel


def _pallas_pad(x_arr, pads, block_batch, batch_axis_last):
    """Run the padding kernel.

    x_arr is (*spatial, NC) when batch_axis_last else (NC, *spatial).
    block_batch = number of collapsed N*C rows handled per grid step.
    """
    if batch_axis_last:
        spatial = x_arr.shape[:-1]
        nc = x_arr.shape[-1]
    else:
        nc = x_arr.shape[0]
        spatial = x_arr.shape[1:]
    out_spatial = tuple(s + 2 * p for s, p in zip(pads, spatial)[::-1][::-1]) \
        if False else tuple(s + 2 * p for s, p in zip(spatial, pads))
    nsp = len(spatial)
    itemsize = jnp.dtype(x_arr.dtype).itemsize

    if batch_axis_last:
        interior = tuple(slice(p, p + s) for p, s in zip(pads, spatial)) + (slice(None),)
        in_block = spatial + (block_batch,)
        out_block = out_spatial + (block_batch,)
        index_map = lambda i: (0,) * nsp + (i,)
        out_shape = out_spatial + (nc,)
    else:
        interior = (slice(None),) + tuple(slice(p, p + s) for p, s in zip(pads, spatial))
        in_block = (block_batch,) + spatial
        out_block = (block_batch,) + out_spatial
        index_map = lambda i: (i,) + (0,) * nsp
        out_shape = (nc,) + out_spatial

    grid = (_cdiv(nc, block_batch),)
    bytes_accessed = nc * (math.prod(spatial) + math.prod(out_spatial)) * itemsize

    return pl.pallas_call(
        _make_pad_kernel(interior),
        out_shape=jax.ShapeDtypeStruct(out_shape, x_arr.dtype),
        grid_spec=pltpu.PrefetchScalarGridSpec(
            num_scalar_prefetch=0,
            grid=grid,
            in_specs=[pl.BlockSpec(in_block, index_map)],
            out_specs=pl.BlockSpec(out_block, index_map),
        ),
        compiler_params=pltpu.CompilerParams(
            dimension_semantics=("parallel",),
            vmem_limit_bytes=_VMEM_LIMIT_BYTES,
        ),
        cost_estimate=pl.CostEstimate(
            flops=0, transcendentals=0, bytes_accessed=bytes_accessed),
    )(x_arr)


def _zero_pad(x, pads):
    """x: (N, C, *spatial); pads: symmetric zero pad per trailing spatial axis."""
    N, C = x.shape[0], x.shape[1]
    spatial = tuple(x.shape[2:])
    assert len(spatial) == len(pads)
    out_spatial = tuple(s + 2 * p for s, p in zip(spatial, pads))
    if all(p == 0 for p in pads):
        return x

    nc = N * C
    dtype = x.dtype
    itemsize = jnp.dtype(dtype).itemsize
    nsp = len(spatial)
    xf = x.reshape((nc,) + spatial)              # collapse N*C (free reshape)

    # ---- Path A: channels-last, lane-dense stores ---------------------------
    in_unit = _tiled_block_bytes(spatial + (128,), dtype)
    out_unit = _tiled_block_bytes(out_spatial + (128,), dtype)
    if nc >= 128 and 2 * (in_unit + out_unit) <= _VMEM_BLOCK_BUDGET:
        n_units = _cdiv(nc, 128)
        units_budget = _VMEM_BLOCK_BUDGET // (2 * (in_unit + out_unit))
        units_target = max(
            1, _TARGET_OUT_BYTES // (math.prod(out_spatial) * 128 * itemsize))
        units = max(1, min(units_budget, units_target, n_units))
        if units >= n_units and n_units >= 2:    # keep >= 2 grid steps (v7x megacore)
            units = _cdiv(n_units, 2)
        xt = jnp.transpose(xf, tuple(range(1, nsp + 1)) + (0,))       # (*spatial, NC)
        out_t = _pallas_pad(xt, pads, units * 128, batch_axis_last=True)
        out = jnp.transpose(out_t, (nsp,) + tuple(range(nsp)))        # (NC, *out_spatial)
        return out.reshape((N, C) + out_spatial)

    # ---- Path B: spatial-last fallback ---------------------------------------
    per_in = _tiled_block_bytes((1,) + spatial, dtype)
    per_out = _tiled_block_bytes((1,) + out_spatial, dtype)
    bb_budget = max(1, _VMEM_BLOCK_BUDGET // (2 * (per_in + per_out)))
    bb_target = max(1, _TARGET_OUT_BYTES // (math.prod(out_spatial) * itemsize))
    bb = max(1, min(bb_budget, bb_target, nc))
    if bb >= nc and nc >= 2:                     # keep >= 2 grid steps (v7x megacore)
        bb = _cdiv(nc, 2)
    out = _pallas_pad(xf, pads, bb, batch_axis_last=False)
    return out.reshape((N, C) + out_spatial)


class ZeroPad:
    """Matches the given PyTorch ZeroPad module's forward semantics."""

    def __init__(self, padding):
        if isinstance(padding, int):
            self.h = padding
            self.w = padding
        else:
            self.h = padding[0]
            self.w = padding[1]

    def __call__(self, x):
        if x.ndim == 4:                          # NCHW
            return _zero_pad(x, (self.h, self.w))
        elif x.ndim == 5:                        # NCDHW
            assert self.h == self.w
            d = self.h
            return _zero_pad(x, (d, d, d))
        else:
            raise ValueError("ZeroPad expects a 4-D or 5-D input")


if __name__ == "__main__":
    key = jax.random.PRNGKey(0)
    k1, k2, k3, k4 = jax.random.split(key, 4)

    # ---- 4-D NCHW, small channel count (spatial-last fallback path) --------
    x2d = jax.random.normal(k1, (2, 4, 16, 16), dtype=jnp.float32)
    y2d = jax.block_until_ready(ZeroPad((2, 3))(x2d))
    ref2d = jnp.pad(x2d, ((0, 0), (0, 0), (2, 2), (3, 3)))
    assert y2d.shape == (2, 4, 20, 22)
    assert jnp.array_equal(y2d, ref2d)

    # ---- 5-D NCDHW (spatial-last fallback path) -----------------------------
    x3d = jax.random.normal(k2, (2, 3, 8, 8, 8), dtype=jnp.float32)
    y3d = jax.block_until_ready(ZeroPad(1)(x3d))
    ref3d = jnp.pad(x3d, ((0, 0), (0, 0), (1, 1), (1, 1), (1, 1)))
    assert y3d.shape == (2, 3, 10, 10, 10)
    assert jnp.array_equal(y3d, ref3d)

    # ---- 4-D NCHW, many channels -> lane-dense channels-last path ----------
    # NC = 192 also exercises a partial final block on the channel grid axis.
    x2d_w = jax.random.normal(k3, (2, 96, 16, 16), dtype=jnp.float32)
    y2d_w = jax.block_until_ready(ZeroPad((2, 3))(x2d_w))
    ref2d_w = jnp.pad(x2d_w, ((0, 0), (0, 0), (2, 2), (3, 3)))
    assert y2d_w.shape == (2, 96, 20, 22)
    assert jnp.array_equal(y2d_w, ref2d_w)

    # ---- 4-D NCHW, N*C not divisible by the block (partial last block) -----
    x2d_r = jax.random.normal(k4, (1, 5, 12, 16), dtype=jnp.float32)
    y2d_r = jax.block_until_ready(ZeroPad(1)(x2d_r))
    ref2d_r = jnp.pad(x2d_r, ((0, 0), (0, 0), (1, 1), (1, 1)))
    assert y2d_r.shape == (1, 5, 14, 18)
    assert jnp.array_equal(y2d_r, ref2d_r)

    print("KERNEL_OK")
</pallas_src>

<mosaic_0001>
module attributes {stable_mosaic.version = 11 : i64} {
  func.func @kernel(%arg0: i32, %arg1: memref<4x16x16xf32, #tpu.memory_space<vmem>>, %arg2: memref<4x20x22xf32, #tpu.memory_space<vmem>>) attributes {dimension_semantics = [#tpu.dimension_semantics<parallel>], iteration_bounds = array<i64: 2>, scalar_prefetch = 0 : i64, scratch_operands = 0 : i64, tpu.core_type = #tpu.core_type<tc>, window_params = [{transform_indices = @transform_0, window_bounds = array<i64: 4, 16, 16>}, {transform_indices = @transform_1, window_bounds = array<i64: 4, 20, 22>}]} {
    %cst = arith.constant 0.000000e+00 : f32
    %0 = vector.broadcast %cst : f32 to vector<4x20x22xf32>
    %c0 = arith.constant 0 : index
    %c0_0 = arith.constant 0 : index
    %c0_1 = arith.constant 0 : index
    %1 = vector.load %arg2[%c0, %c0_0, %c0_1] : memref<4x20x22xf32, #tpu.memory_space<vmem>>, vector<4x20x22xf32>
    tpu.vector_store %arg2[%c0, %c0_0, %c0_1], %0 {strides = array<i32>} : memref<4x20x22xf32, #tpu.memory_space<vmem>>, vector<4x20x22xf32>,
    %c0_2 = arith.constant 0 : index
    %c0_3 = arith.constant 0 : index
    %c0_4 = arith.constant 0 : index
    %2 = vector.load %arg1[%c0_2, %c0_3, %c0_4] : memref<4x16x16xf32, #tpu.memory_space<vmem>>, vector<4x16x16xf32>
    %c0_5 = arith.constant 0 : index
    %c2 = arith.constant 2 : index
    %c3 = arith.constant 3 : index
    %3 = vector.load %arg2[%c0_5, %c2, %c3] : memref<4x20x22xf32, #tpu.memory_space<vmem>>, vector<4x16x16xf32>
    tpu.vector_store %arg2[%c0_5, %c2, %c3], %2 {strides = array<i32>} : memref<4x20x22xf32, #tpu.memory_space<vmem>>, vector<4x16x16xf32>,
    return
  }
  func.func @transform_0(%arg0: i32) -> (i32, i32, i32) {
    %c0_i32 = arith.constant 0 : i32
    %c0_i32_0 = arith.constant 0 : i32
    %c0_i32_1 = arith.constant 0 : i32
    return %arg0, %c0_i32, %c0_i32_0 : i32, i32, i32
  }
  func.func @transform_1(%arg0: i32) -> (i32, i32, i32) {
    %c0_i32 = arith.constant 0 : i32
    %c0_i32_0 = arith.constant 0 : i32
    %c0_i32_1 = arith.constant 0 : i32
    return %arg0, %c0_i32, %c0_i32_0 : i32, i32, i32
  }
}

</mosaic_0001>

<llo_original>
// kernel: tpu_custom_call.1
$region0: #{tpu_custom_call.1}
  #allocation0 [shape = 'u32[]', space=smem, size = 0x4, offset = 0x4, fixed_abs, tag = 'smem constant byte address 0x4 - core index']
  #allocation1 [shape = 'u32[144,128]{1,0:T(1,128)}', space=vmem, size = 0x12000, scoped, tag = 'internal scratch']
  %s0 = inlined_call_operand.hbm [shape: f32[8,16,16], index: 0, kind: input, shape index: {}]
  %s1 = inlined_call_operand.vmem [shape: f32[8,20,22], index: 1, kind: output, shape index: {}]
  %s2 = sld [smem:[#allocation0]]
  $region41: #{tpu_custom_call.1} parent=0
    _
  %s4 = ssub.s32 1, %s2
  %s5 = scalar_select 0, %s4, %s2
  $region1: #{tpu_custom_call.1} parent=0
    #allocation2 [shape = 'u8[65536]{0}', space=vmem, size = 0x10000, scoped, tag = 'input window, operand 0']
    #allocation3 [shape = 's32[2]{0}', space=sflag, size = 0x8, scoped, tag = 'scoped memory for tpu_custom_call.1']
    %6 = vsyncpa [#allocation3], 0
    %s7 = scalar_lea.sflag [#allocation3], 1
    %8 = vsyncpa %s7, 0
    loop: start=0, step=1, limit=4
    $region2: #{tpu_custom_call.1} parent=1 // loop_pre_header
      _
    $region3: #{tpu_custom_call.1} parent=1 // loop_header
      %s10 = sphi 0, %s14
      %p11 = scmp.ge.s32.totalorder %s10, 4
      %s20 = sphi 0, %s22
      %s23 = sphi 0, %s20
      %s24 = sphi 0, %s23
      %s40 = sphi 0, %s24
      %s46 = sphi 0, %s48
      %s49 = sphi 0, %s46
      %s50 = sphi 0, %s49
      %s66 = sphi 0, %s50
    $region4: #{tpu_custom_call.1} parent=1 // loop_header_branch
      %13 = sbr.rel (%p11) target = $region8
    $region5: #{tpu_custom_call.1} parent=1 // loop_body
      %s15 = ssub.s32 %s10, 1
      %s16 = ssub.s32 %s10, 2
      %s17 = sadd.s32 %s10, 1
      %s18 = ssub.s32 %s10, %s17
      %p19 = scmp.eq.s32.totalorder %s18, 0
      %s21 = sadd.s32 %s20, 1
      %s22 = scalar_select %p19, %s20, %s21
      %p25 = pneg %p19
      %p26 = scmp.eq.s32.totalorder %s10, 1
      %p27 = por %p25, %p26
      %p28 = scmp.ne.s32.totalorder %s20, %s23
      %p29 = scmp.eq.s32.totalorder %s10, 0
      %p30 = por %p28, %p29
      %p31 = scmp.ne.s32.totalorder %s20, %s23
      %p32 = scmp.eq.s32.totalorder %s15, 1
      %p33 = por %p31, %p32
      %p34 = scmp.ne.s32.totalorder %s23, %s24
      %p35 = scmp.eq.s32.totalorder %s15, 0
      %p36 = por %p34, %p35
      %p37 = scmp.ne.s32.totalorder %s23, %s24
      %p38 = scmp.eq.s32.totalorder %s16, 1
      %p39 = por %p37, %p38
      %p41 = scmp.ne.s32.totalorder %s24, %s40
      %p42 = scmp.eq.s32.totalorder %s16, 0
      %p43 = por %p41, %p42
      %s44 = ssub.s32 %s10, %s17
      %p45 = scmp.eq.s32.totalorder %s44, 0
      %s47 = sadd.s32 %s46, 1
      %s48 = scalar_select %p45, %s46, %s47
      %p51 = pneg %p45
      %p52 = scmp.eq.s32.totalorder %s10, 1
      %p53 = por %p51, %p52
      %p54 = scmp.ne.s32.totalorder %s46, %s49
      %p55 = scmp.eq.s32.totalorder %s10, 0
      %p56 = por %p54, %p55
      %p57 = scmp.ne.s32.totalorder %s46, %s49
      %p58 = scmp.eq.s32.totalorder %s15, 1
      %p59 = por %p57, %p58
      %p60 = scmp.ne.s32.totalorder %s49, %s50
      %p61 = scmp.eq.s32.totalorder %s15, 0
      %p62 = por %p60, %p61
      %p63 = scmp.ne.s32.totalorder %s49, %s50
      %p64 = scmp.eq.s32.totalorder %s16, 1
      %p65 = por %p63, %p64
      %p67 = scmp.ne.s32.totalorder %s50, %s66
      %p68 = scmp.eq.s32.totalorder %s16, 0
      %p69 = por %p67, %p68
      %p70 = scmp.le.s32.totalorder 1, %s10
      %p71 = scmp.lt.s32.totalorder %s10, 3
      %p72 = pnand %p70, %p71
      %p73 = pneg %p72
      // Predicated region
      $region9: #{tpu_custom_call.1} parent=5 // pred_check
        _
      $region10: #{tpu_custom_call.1} parent=5 // pred_check_branch
        %75 = sbr.rel (%p72) target = $region12
      $region11: #{tpu_custom_call.1} parent=5 // pred_region
        %s76 = ssub.s32 %s10, 1
      $region12: #{tpu_custom_call.1} parent=5 // pred_fallthru
        _
      %p77 = scmp.lt.s32.totalorder %s10, 2
      // Predicated region
      $region13: #{tpu_custom_call.1} parent=5 // pred_check
        %p78 = pneg %p77
      $region14: #{tpu_custom_call.1} parent=5 // pred_check_branch
        %80 = sbr.rel (%p78) target = $region16
      $region15: #{tpu_custom_call.1} parent=5 // pred_region
        // Predicated region
        $region17: #{tpu_custom_call.1} parent=15 // pred_check
          %p81 = pneg %p30
        $region18: #{tpu_custom_call.1} parent=15 // pred_check_branch
          %83 = sbr.rel (%p81) target = $region20
        $region19: #{tpu_custom_call.1} parent=15 // pred_region
          %s84 = sand.u32 %s20, 1
          %s85 = scalar_lea.sflag [#allocation3], %s84
          %s86 = sand.u32 %s20, 1
          %s87 = smul.addr %s86, 64
          %s88 = scalar_lea.vmem [#allocation2], %s87
          %s89 = smul.u32 4, %s10
          %s91 = ssub.s32 1024, 1024
          %92 = vsyncadd %s85, %s91
          %s93 = smul.addr %s89, 2
          %s94 = smul.addr %s93, 128
          %s95 = scalar_lea.hbm %s0, %s94
          %s96 = sshll.u32 %s88, 4
          %s97 = int_to_ptr.vmem [resolvable:$true] %s96
          %102 = dma.hbm_to_vmem [thread:$0]  %s95, 1024, %s97, %s85, 128, 128, 8
        $region20: #{tpu_custom_call.1} parent=15 // pred_fallthru
          _
      $region16: #{tpu_custom_call.1} parent=5 // pred_fallthru
        _
      %p103 = scmp.le.s32.totalorder 1, %s10
      %p104 = scmp.lt.s32.totalorder %s10, 3
      %p105 = pnand %p103, %p104
      %p106 = pneg %p105
      // Predicated region
      $region21: #{tpu_custom_call.1} parent=5 // pred_check
        _
      $region22: #{tpu_custom_call.1} parent=5 // pred_check_branch
        %108 = sbr.rel (%p105) target = $region24
      $region23: #{tpu_custom_call.1} parent=5 // pred_region
        %s109 = ssub.s32 %s10, 1
        %s110 = sand.u32 %s23, 1
        %s111 = scalar_lea.sflag [#allocation3], %s110
        %s112 = sand.u32 %s23, 1
        %s113 = smul.addr %s112, 64
        %s114 = scalar_lea.vmem [#allocation2], %s113
        // Predicated region
        $region25: #{tpu_custom_call.1} parent=23 // pred_check
          %p115 = pneg %p36
        $region26: #{tpu_custom_call.1} parent=23 // pred_check_branch
          %117 = sbr.rel (%p115) target = $region28
        $region27: #{tpu_custom_call.1} parent=23 // pred_region
          %118 = dma.done %s111, 1024
        $region28: #{tpu_custom_call.1} parent=23 // pred_fallthru
          _
        %s119 = sand.u32 %s23, 1
        %s120 = scalar_lea.sflag [#allocation3], %s119
        %s121 = sand.u32 %s23, 1
        %s122 = smul.addr %s121, 64
        %s123 = scalar_lea.vmem [#allocation2], %s122
        %p124 = pneg %p36
        %p125 = pneg %p33
        %p126 = pneg %p62
        %p127 = pneg %p59
        %s128 = smul.u32 4, %s15
        %p129 = scmp.lt.s32.totalorder %s128, 7
        %s130 = scalar_select %p129, %s128, 7
        %s131 = smul.addr %s130, 3
        %s132 = smul.addr %s131, 8
        %s133 = scalar_lea.vmem %s1, %s132
        %s134 = smul.u32 4, %s15
        %s135 = smul.u32 4, %s15
        %p136 = scmp.lt.s32.totalorder %s135, 7
        %s137 = scalar_select %p136, %s135, 7
        %s138 = smul.addr %s137, 3
        %s139 = smul.addr %s138, 8
        %s140 = scalar_lea.vmem %s1, %s139
        %s141 = smul.u32 4, %s15
        %vm142 = vcmask 179200
        %143 = vst.msk [vmem:[%s140] sm:$0xff] %vm142, 0.0
        %144 = vst.msk [vmem:[%s140 + $0x8] sm:$0xff] %vm142, 0.0
        %vm145 = vcmask 175104
        %146 = vst.msk [vmem:[%s140 + $0x10] sm:$0xf] %vm145, 0.0
        %147 = vst.msk [vmem:[%s140 + $0x18] sm:$0xff] %vm142, 0.0
        %148 = vst.msk [vmem:[%s140 + $0x20] sm:$0xff] %vm142, 0.0
        %149 = vst.msk [vmem:[%s140 + $0x28] sm:$0xf] %vm145, 0.0
        %150 = vst.msk [vmem:[%s140 + $0x30] sm:$0xff] %vm142, 0.0
        %151 = vst.msk [vmem:[%s140 + $0x38] sm:$0xff] %vm142, 0.0
        %152 = vst.msk [vmem:[%s140 + $0x40] sm:$0xf] %vm145, 0.0
        %153 = vst.msk [vmem:[%s140 + $0x48] sm:$0xff] %vm142, 0.0
        %154 = vst.msk [vmem:[%s140 + $0x50] sm:$0xff] %vm142, 0.0
        %155 = vst.msk [vmem:[%s140 + $0x58] sm:$0xf] %vm145, 0.0
        %v156 = vld [vmem:[%s114] sm:$0xff]
        %v157 = vld [vmem:[%s114 + $0x8] sm:$0xff]
        %v158 = vld [vmem:[%s114 + $0x10] sm:$0xff]
        %v159 = vld [vmem:[%s114 + $0x18] sm:$0xff]
        %v160 = vld [vmem:[%s114 + $0x20] sm:$0xff]
        %v161 = vld [vmem:[%s114 + $0x28] sm:$0xff]
        %v162 = vld [vmem:[%s114 + $0x30] sm:$0xff]
        %v163 = vld [vmem:[%s114 + $0x38] sm:$0xff]
        %172 = vrot.lane.b32.xlu0 %v156, 3
        %v173 = vpop.permute.xlu0 %172
        %174 = vrot.lane.b32.xlu0 %v157, 3
        %v175 = vpop.permute.xlu0 %174
        %176 = vrot.lane.b32.xlu0 %v158, 3
        %v177 = vpop.permute.xlu0 %176
        %178 = vrot.lane.b32.xlu0 %v159, 3
        %v179 = vpop.permute.xlu0 %178
        %180 = vrot.lane.b32.xlu0 %v160, 3
        %v181 = vpop.permute.xlu0 %180
        %182 = vrot.lane.b32.xlu0 %v161, 3
        %v183 = vpop.permute.xlu0 %182
        %184 = vrot.lane.b32.xlu0 %v162, 3
        %v185 = vpop.permute.xlu0 %184
        %186 = vrot.lane.b32.xlu0 %v163, 3
        %v187 = vpop.permute.xlu0 %186
        %vm196 = vcmask 154648
        %197 = vst.msk [vmem:[%s140 + $0x2] sm:$0xff] %vm196, %v173
        %198 = vst.msk [vmem:[%s140 + $0xa] sm:$0xff] %vm196, %v175
        %199 = vst.msk [vmem:[%s140 + $0x1a] sm:$0xff] %vm196, %v177
        %200 = vst.msk [vmem:[%s140 + $0x22] sm:$0xff] %vm196, %v179
        %201 = vst.msk [vmem:[%s140 + $0x32] sm:$0xff] %vm196, %v181
        %202 = vst.msk [vmem:[%s140 + $0x3a] sm:$0xff] %vm196, %v183
        %203 = vst.msk [vmem:[%s140 + $0x4a] sm:$0xff] %vm196, %v185
        %204 = vst.msk [vmem:[%s140 + $0x52] sm:$0xff] %vm196, %v187
        %s205 = smul.u32 4, %s15
        %p206 = scmp.lt.s32.totalorder %s205, 7
        %s207 = scalar_select %p206, %s205, 7
        %s208 = smul.addr %s207, 3
        %s209 = smul.addr %s208, 8
        %s210 = scalar_lea.vmem %s1, %s209
        // Predicated region
        $region29: #{tpu_custom_call.1} parent=23 // pred_check
          %p211 = pneg %p59
        $region30: #{tpu_custom_call.1} parent=23 // pred_check_branch
          %213 = sbr.rel (%p211) target = $region32
        $region31: #{tpu_custom_call.1} parent=23 // pred_region
          %s214 = smul.u32 4, %s15
        $region32: #{tpu_custom_call.1} parent=23 // pred_fallthru
          _
      $region24: #{tpu_custom_call.1} parent=5 // pred_fallthru
        _
      %p215 = scmp.le.s32.totalorder 2, %s10
      // Predicated region
      $region33: #{tpu_custom_call.1} parent=5 // pred_check
        %p216 = pneg %p215
      $region34: #{tpu_custom_call.1} parent=5 // pred_check_branch
        %218 = sbr.rel (%p216) target = $region36
      $region35: #{tpu_custom_call.1} parent=5 // pred_region
        %s219 = ssub.s32 %s10, 2
        // Predicated region
        $region37: #{tpu_custom_call.1} parent=35 // pred_check
          %p220 = pneg %p65
        $region38: #{tpu_custom_call.1} parent=35 // pred_check_branch
          %222 = sbr.rel (%p220) target = $region40
        $region39: #{tpu_custom_call.1} parent=35 // pred_region
          %s223 = smul.u32 4, %s16
          %p224 = scmp.lt.s32.totalorder %s223, 7
          %s225 = scalar_select %p224, %s223, 7
          %s226 = smul.addr %s225, 3
          %s227 = smul.addr %s226, 8
          %s228 = scalar_lea.vmem %s1, %s227
        $region40: #{tpu_custom_call.1} parent=35 // pred_fallthru
          _
      $region36: #{tpu_custom_call.1} parent=5 // pred_fallthru
        _
    $region6: #{tpu_custom_call.1} parent=1 // loop_footer
      %s14 = sadd.s32 1, %s10
    $region7: #{tpu_custom_call.1} parent=1 // loop_footer_branch
      %9 = sbr.rel target = $region3
    $region8: #{tpu_custom_call.1} parent=1 // loop_exit
      _
    %229 = vsyncpa [#allocation3], 1
    %s230 = scalar_lea.sflag [#allocation3], 1
    %231 = vsyncpa %s230, 1

</llo_original>
